<compile_context>
chip_gen: v7x
topology: tpu7x:2x2x1
jax: 0.10.0
libtpu: 0.0.40
codegen_flags: <defaults>
</compile_context>

<pallas_src>
import functools

import jax
import jax.numpy as jnp
from jax import lax
from jax.experimental import pallas as pl
from jax.experimental.pallas import tpu as pltpu


def _rand_erase_kernel(start_ref, x_ref, o_ref, *, erase_width, vertical):
    """start_ref: SMEM (B,) int32 effective start (== extent => no erase).
    x_ref/o_ref: VMEM (H, W_tile) blocks (batch dim squeezed)."""
    b = pl.program_id(0)
    lo = start_ref[b]                      # scalar i32 from SMEM
    hi = lo + erase_width                  # static width added at scalar level
    Hb, Wb = o_ref.shape
    if vertical:
        # Column index, offset by this block's position along the lane axis.
        idx = lax.broadcasted_iota(jnp.int32, (Hb, Wb), 1) + pl.program_id(1) * Wb
    else:
        # Row index (H is never tiled, so it is already global).
        idx = lax.broadcasted_iota(jnp.int32, (Hb, Wb), 0)
    erase = (idx >= lo) & (idx < hi)       # all-false when lo == extent
    o_ref[...] = jnp.where(erase, jnp.zeros((), o_ref.dtype), x_ref[...])


def _pick_w_tile(H, W, dtype):
    """Largest lane-aligned W tile that keeps a double-buffered pipeline well
    under the v7x scoped-VMEM default (budget ~2 MiB per block)."""
    if W % 128 != 0:
        return W                           # full-extent block is always legal
    itemsize = jnp.dtype(dtype).itemsize
    budget = 2 * 1024 * 1024
    max_lanes = max(128, (budget // max(H * itemsize, 1)) // 128 * 128)
    return min(W, max_lanes)


def draw_erase_params(key, batch, extent, p, ratio):
    """Replaces the Python-stdlib RNG of the reference module with jax.random.

    Returns (eff_start, erase_width). eff_start == extent means "no erase" for
    that batch element (the Bernoulli flag is folded into the start index)."""
    erase_width = int(ratio * extent)
    k_flag, k_start = jax.random.split(key)
    do_erase = jax.random.bernoulli(k_flag, p, (batch,))
    hi_excl = max(extent - erase_width + 1, 1)     # random.randint is inclusive
    starts = jax.random.randint(k_start, (batch,), 0, hi_excl, dtype=jnp.int32)
    eff_start = jnp.where(do_erase, starts, jnp.int32(extent)).astype(jnp.int32)
    return eff_start, erase_width


def rand_erase_apply(x, eff_start, erase_width, *, vertical=True):
    """x: (B, H, W). eff_start: (B,) int32. Returns erased copy of x."""
    B, H, W = x.shape
    w_tile = _pick_w_tile(H, W, x.dtype)
    num_wt = W // w_tile

    kernel = functools.partial(_rand_erase_kernel,
                               erase_width=erase_width, vertical=vertical)

    grid_spec = pltpu.PrefetchScalarGridSpec(
        num_scalar_prefetch=1,
        grid=(B, num_wt),
        in_specs=[pl.BlockSpec((None, H, w_tile), lambda b, wt, s: (b, 0, wt))],
        out_specs=pl.BlockSpec((None, H, w_tile), lambda b, wt, s: (b, 0, wt)),
    )
    return pl.pallas_call(
        kernel,
        out_shape=jax.ShapeDtypeStruct(x.shape, x.dtype),
        grid_spec=grid_spec,
        compiler_params=pltpu.CompilerParams(
            dimension_semantics=("parallel", "parallel")),
    )(eff_start, x)


def my_rand_erase(x, key, *, p=0.5, ratio=0.5, vertical=True, training=True):
    """Forward pass of MyRandErase. x: (B, H, W)."""
    if not training:
        return x
    B, H, W = x.shape
    extent = W if vertical else H
    eff_start, erase_width = draw_erase_params(key, B, extent, p, ratio)
    return rand_erase_apply(x, eff_start, erase_width, vertical=vertical)


if __name__ == "__main__":
    key = jax.random.PRNGKey(0)
    k_x, k_erase_v, k_erase_h = jax.random.split(key, 3)

    B, H, W = 2, 16, 128                    # batch, height, width (lane-aligned)
    x = jax.random.normal(k_x, (B, H, W), dtype=jnp.float32)

    # ---- vertical erase (module default) ----
    eff_start_v, ew_v = draw_erase_params(k_erase_v, B, W, p=0.5, ratio=0.5)
    out_v = rand_erase_apply(x, eff_start_v, ew_v, vertical=True)
    out_v = jax.block_until_ready(out_v)

    col = jnp.arange(W)[None, None, :]
    mask_v = (col >= eff_start_v[:, None, None]) & (col < eff_start_v[:, None, None] + ew_v)
    ref_v = jnp.where(mask_v, 0.0, x)
    assert out_v.shape == x.shape
    assert jnp.allclose(out_v, ref_v), "vertical MyRandErase kernel mismatch"

    # ---- horizontal erase (vertical=False) ----
    eff_start_h, ew_h = draw_erase_params(k_erase_h, B, H, p=0.5, ratio=0.5)
    out_h = rand_erase_apply(x, eff_start_h, ew_h, vertical=False)
    out_h = jax.block_until_ready(out_h)

    row = jnp.arange(H)[None, :, None]
    mask_h = (row >= eff_start_h[:, None, None]) & (row < eff_start_h[:, None, None] + ew_h)
    ref_h = jnp.where(mask_h, 0.0, x)
    assert jnp.allclose(out_h, ref_h), "horizontal MyRandErase kernel mismatch"

    # ---- eval mode passes through unchanged ----
    out_eval = my_rand_erase(x, key, training=False)
    assert out_eval is x

    print("KERNEL_OK")
</pallas_src>

<mosaic_0001>
module attributes {stable_mosaic.version = 11 : i64} {
  func.func @_rand_erase_kernel(%arg0: i32, %arg1: i32, %arg2: memref<2xi32, #tpu.memory_space<smem>>, %arg3: memref<1x16x128xf32, #tpu.memory_space<vmem>>, %arg4: memref<1x16x128xf32, #tpu.memory_space<vmem>>) attributes {dimension_semantics = [#tpu.dimension_semantics<parallel>, #tpu.dimension_semantics<parallel>], iteration_bounds = array<i64: 2, 1>, scalar_prefetch = 1 : i64, scratch_operands = 0 : i64, tpu.core_type = #tpu.core_type<tc>, window_params = [{transform_indices = @transform_0, window_bounds = array<i64: 1, 16, 128>}, {transform_indices = @transform_1, window_bounds = array<i64: 1, 16, 128>}]} {
    %0 = arith.index_cast %arg0 : i32 to index
    %1 = memref.load %arg2[%0] : memref<2xi32, #tpu.memory_space<smem>>
    %c64_i32 = arith.constant 64 : i32
    %2 = arith.addi %1, %c64_i32 : i32
    %3 = tpu.iota {dimensions = array<i32: 1>} : vector<16x128xi32>
    %c128_i32 = arith.constant 128 : i32
    %4 = arith.muli %arg1, %c128_i32 : i32
    %5 = vector.broadcast %4 : i32 to vector<16x128xi32>
    %6 = arith.addi %3, %5 : vector<16x128xi32>
    %7 = vector.broadcast %1 : i32 to vector<16x128xi32>
    %8 = arith.cmpi sge, %6, %7 : vector<16x128xi32>
    %9 = vector.broadcast %2 : i32 to vector<16x128xi32>
    %10 = arith.cmpi slt, %6, %9 : vector<16x128xi32>
    %11 = arith.andi %8, %10 : vector<16x128xi1>
    %c0 = arith.constant 0 : index
    %c0_0 = arith.constant 0 : index
    %c0_1 = arith.constant 0 : index
    %12 = vector.load %arg3[%c0, %c0_0, %c0_1] : memref<1x16x128xf32, #tpu.memory_space<vmem>>, vector<1x16x128xf32>
    %13 = vector.shape_cast %12 : vector<1x16x128xf32> to vector<16x128xf32>
    %cst = arith.constant 0.000000e+00 : f32
    %14 = vector.broadcast %cst : f32 to vector<16x128xf32>
    %15 = arith.select %11, %14, %13 : vector<16x128xi1>, vector<16x128xf32>
    %c0_2 = arith.constant 0 : index
    %c0_3 = arith.constant 0 : index
    %c0_4 = arith.constant 0 : index
    %16 = vector.load %arg4[%c0_2, %c0_3, %c0_4] : memref<1x16x128xf32, #tpu.memory_space<vmem>>, vector<1x16x128xf32>
    %17 = vector.shape_cast %16 : vector<1x16x128xf32> to vector<16x128xf32>
    %18 = vector.shape_cast %15 : vector<16x128xf32> to vector<1x16x128xf32>
    tpu.vector_store %arg4[%c0_2, %c0_3, %c0_4], %18 {strides = array<i32>} : memref<1x16x128xf32, #tpu.memory_space<vmem>>, vector<1x16x128xf32>,
    return
  }
  func.func @transform_0(%arg0: i32, %arg1: i32, %arg2: memref<2xi32, #tpu.memory_space<smem>>) -> (i32, i32, i32) {
    %c0_i32 = arith.constant 0 : i32
    %c0_i32_0 = arith.constant 0 : i32
    return %arg0, %c0_i32, %arg1 : i32, i32, i32
  }
  func.func @transform_1(%arg0: i32, %arg1: i32, %arg2: memref<2xi32, #tpu.memory_space<smem>>) -> (i32, i32, i32) {
    %c0_i32 = arith.constant 0 : i32
    %c0_i32_0 = arith.constant 0 : i32
    return %arg0, %c0_i32, %arg1 : i32, i32, i32
  }
}

</mosaic_0001>

<llo_original>
// kernel: tpu_custom_call.1
$region0: #{tpu_custom_call.1}
  #allocation0 [shape = 'u32[]', space=smem, size = 0x4, offset = 0x4, fixed_abs, tag = 'smem constant byte address 0x4 - core index']
  #allocation1 [shape = 'u32[144,128]{1,0:T(1,128)}', space=vmem, size = 0x12000, scoped, tag = 'internal scratch']
  #allocation2 [shape = 's32[1]{0}', space=sflag, size = 0x4, scoped, tag = 'scoped memory for tpu_custom_call.1']
  #allocation3 [shape = 'u8[512]{0}', space=smem, size = 0x200, scoped, tag = 'prefetched SMEM operand 0']
  %s0 = inlined_call_operand.hbm [shape: s32[2], index: 0, kind: input, shape index: {}]
  %s1 = inlined_call_operand.hbm [shape: f32[2,16,128], index: 1, kind: input, shape index: {}]
  %s2 = inlined_call_operand.hbm [shape: f32[2,16,128], index: 2, kind: output, shape index: {}]
  %s3 = sld [smem:[#allocation0]]
  $region41: #{tpu_custom_call.1} parent=0
    _
  %s5 = ssub.s32 1, %s3
  %s6 = scalar_select 0, %s5, %s3
  %8 = dma.hbm_to_smem %s0, 16, [#allocation3], [#allocation2]
  %9 = dma.done [#allocation2], 16
  %10 = sfence
  $region1: #{tpu_custom_call.1} parent=0
    #allocation4 [shape = 'u8[16384]{0}', space=vmem, size = 0x4000, scoped, tag = 'input window, operand 1']
    #allocation5 [shape = 's32[2]{0}', space=sflag, size = 0x8, scoped, tag = 'scoped memory for tpu_custom_call.1']
    #allocation6 [shape = 's32[2]{0}', space=sflag, size = 0x8, scoped, tag = 'scoped memory for tpu_custom_call.1']
    #allocation7 [shape = 'u8[16384]{0}', space=vmem, size = 0x4000, scoped, tag = 'output window, operand 0']
    %11 = vsyncpa [#allocation5], 0
    %s12 = scalar_lea.sflag [#allocation5], 1
    %13 = vsyncpa %s12, 0
    %14 = vsyncpa [#allocation6], 0
    %s15 = scalar_lea.sflag [#allocation6], 1
    %16 = vsyncpa %s15, 0
    loop: start=0, step=1, limit=4
    $region2: #{tpu_custom_call.1} parent=1 // loop_pre_header
      _
    $region3: #{tpu_custom_call.1} parent=1 // loop_header
      %s18 = sphi 0, %s22
      %p19 = scmp.ge.s32.totalorder %s18, 4
      %s25 = sphi 0, %s37
      %s26 = sphi 0, %s33
      %s27 = sphi 0, %s25
      %s28 = sphi 0, %s26
      %s29 = sphi 0, %s27
      %s30 = sphi 0, %s28
      %s42 = sphi 0, %s44
      %s45 = sphi 0, %s42
      %s46 = sphi 0, %s45
      %s62 = sphi 0, %s46
      %s70 = sphi 0, %s72
      %s73 = sphi 0, %s70
      %s74 = sphi 0, %s73
      %s90 = sphi 0, %s74
    $region4: #{tpu_custom_call.1} parent=1 // loop_header_branch
      %21 = sbr.rel (%p19) target = $region8
    $region5: #{tpu_custom_call.1} parent=1 // loop_body
      %s23 = ssub.s32 %s18, 1
      %s24 = ssub.s32 %s18, 2
      %s31 = sadd.s32 1, %s26
      %p32 = scmp.ge.s32.totalorder %s31, 1
      %s33 = scalar_select %p32, 0, %s31
      %s34 = sadd.s32 1, %s25
      %s35 = scalar_select %p32, %s34, %s25
      %p36 = scmp.ge.s32.totalorder %s35, 2
      %s37 = scalar_select %p36, 0, %s35
      %s38 = ssub.s32 %s25, %s37
      %s39 = ssub.s32 %s26, %s33
      %s40 = sor.u32 %s38, %s39
      %p41 = scmp.eq.s32.totalorder %s40, 0
      %s43 = sadd.s32 %s42, 1
      %s44 = scalar_select %p41, %s42, %s43
      %p47 = pneg %p41
      %p48 = scmp.eq.s32.totalorder %s18, 1
      %p49 = por %p47, %p48
      %p50 = scmp.ne.s32.totalorder %s42, %s45
      %p51 = scmp.eq.s32.totalorder %s18, 0
      %p52 = por %p50, %p51
      %p53 = scmp.ne.s32.totalorder %s42, %s45
      %p54 = scmp.eq.s32.totalorder %s23, 1
      %p55 = por %p53, %p54
      %p56 = scmp.ne.s32.totalorder %s45, %s46
      %p57 = scmp.eq.s32.totalorder %s23, 0
      %p58 = por %p56, %p57
      %p59 = scmp.ne.s32.totalorder %s45, %s46
      %p60 = scmp.eq.s32.totalorder %s24, 1
      %p61 = por %p59, %p60
      %p63 = scmp.ne.s32.totalorder %s46, %s62
      %p64 = scmp.eq.s32.totalorder %s24, 0
      %p65 = por %p63, %p64
      %s66 = ssub.s32 %s25, %s37
      %s67 = ssub.s32 %s26, %s33
      %s68 = sor.u32 %s66, %s67
      %p69 = scmp.eq.s32.totalorder %s68, 0
      %s71 = sadd.s32 %s70, 1
      %s72 = scalar_select %p69, %s70, %s71
      %p75 = pneg %p69
      %p76 = scmp.eq.s32.totalorder %s18, 1
      %p77 = por %p75, %p76
      %p78 = scmp.ne.s32.totalorder %s70, %s73
      %p79 = scmp.eq.s32.totalorder %s18, 0
      %p80 = por %p78, %p79
      %p81 = scmp.ne.s32.totalorder %s70, %s73
      %p82 = scmp.eq.s32.totalorder %s23, 1
      %p83 = por %p81, %p82
      %p84 = scmp.ne.s32.totalorder %s73, %s74
      %p85 = scmp.eq.s32.totalorder %s23, 0
      %p86 = por %p84, %p85
      %p87 = scmp.ne.s32.totalorder %s73, %s74
      %p88 = scmp.eq.s32.totalorder %s24, 1
      %p89 = por %p87, %p88
      %p91 = scmp.ne.s32.totalorder %s74, %s90
      %p92 = scmp.eq.s32.totalorder %s24, 0
      %p93 = por %p91, %p92
      %p94 = scmp.le.s32.totalorder 1, %s18
      %p95 = scmp.lt.s32.totalorder %s18, 3
      %p96 = pnand %p94, %p95
      %p97 = pneg %p96
      // Predicated region
      $region9: #{tpu_custom_call.1} parent=5 // pred_check
        _
      $region10: #{tpu_custom_call.1} parent=5 // pred_check_branch
        %99 = sbr.rel (%p96) target = $region12
      $region11: #{tpu_custom_call.1} parent=5 // pred_region
        %s100 = ssub.s32 %s18, 1
      $region12: #{tpu_custom_call.1} parent=5 // pred_fallthru
        _
      %p101 = scmp.lt.s32.totalorder %s18, 2
      // Predicated region
      $region13: #{tpu_custom_call.1} parent=5 // pred_check
        %p102 = pneg %p101
      $region14: #{tpu_custom_call.1} parent=5 // pred_check_branch
        %104 = sbr.rel (%p102) target = $region16
      $region15: #{tpu_custom_call.1} parent=5 // pred_region
        // Predicated region
        $region17: #{tpu_custom_call.1} parent=15 // pred_check
          %p105 = pneg %p52
        $region18: #{tpu_custom_call.1} parent=15 // pred_check_branch
          %107 = sbr.rel (%p105) target = $region20
        $region19: #{tpu_custom_call.1} parent=15 // pred_region
          %s108 = sand.u32 %s42, 1
          %s109 = scalar_lea.sflag [#allocation5], %s108
          %s110 = sand.u32 %s42, 1
          %s111 = smul.addr %s110, 16
          %s112 = scalar_lea.vmem [#allocation4], %s111
          %s114 = ssub.s32 256, 256
          %115 = vsyncadd %s109, %s114
          %s116 = smul.addr %s25, 2
          %s117 = sadd.s32 %s26, %s116
          %s118 = smul.addr %s117, 128
          %s119 = scalar_lea.hbm %s1, %s118
          %s120 = sshll.u32 %s112, 4
          %s121 = int_to_ptr.vmem [resolvable:$true] %s120
          %126 = dma.hbm_to_vmem [thread:$0]  %s119, 256, %s121, %s109, 128, 128, 8
        $region20: #{tpu_custom_call.1} parent=15 // pred_fallthru
          _
      $region16: #{tpu_custom_call.1} parent=5 // pred_fallthru
        _
      %p127 = scmp.le.s32.totalorder 1, %s18
      %p128 = scmp.lt.s32.totalorder %s18, 3
      %p129 = pnand %p127, %p128
      %p130 = pneg %p129
      // Predicated region
      $region21: #{tpu_custom_call.1} parent=5 // pred_check
        _
      $region22: #{tpu_custom_call.1} parent=5 // pred_check_branch
        %132 = sbr.rel (%p129) target = $region24
      $region23: #{tpu_custom_call.1} parent=5 // pred_region
        %s133 = ssub.s32 %s18, 1
        %s134 = sand.u32 %s45, 1
        %s135 = scalar_lea.sflag [#allocation5], %s134
        %s136 = sand.u32 %s45, 1
        %s137 = smul.addr %s136, 16
        %s138 = scalar_lea.vmem [#allocation4], %s137
        // Predicated region
        $region25: #{tpu_custom_call.1} parent=23 // pred_check
          %p139 = pneg %p58
        $region26: #{tpu_custom_call.1} parent=23 // pred_check_branch
          %141 = sbr.rel (%p139) target = $region28
        $region27: #{tpu_custom_call.1} parent=23 // pred_region
          %142 = dma.done %s135, 256
        $region28: #{tpu_custom_call.1} parent=23 // pred_fallthru
          _
        %s143 = sand.u32 %s45, 1
        %s144 = scalar_lea.sflag [#allocation5], %s143
        %s145 = sand.u32 %s45, 1
        %s146 = smul.addr %s145, 16
        %s147 = scalar_lea.vmem [#allocation4], %s146
        %p148 = pneg %p58
        %p149 = pneg %p55
        %p150 = pneg %p86
        %p151 = pneg %p83
        %s152 = sand.u32 %s73, 1
        %s153 = scalar_lea.sflag [#allocation6], %s152
        %s154 = sand.u32 %s73, 1
        %s155 = smul.addr %s154, 16
        %s156 = scalar_lea.vmem [#allocation7], %s155
        %s157 = sld [smem:[#allocation3 + %s27]]
        %s158 = sadd.s32 %s157, 64
        %v159 = vlaneseq
        %v160 = vand.u32 %v159, 127
        %s161 = smul.u32 %s28, 128
        %v162 = vstv %s161
        %v163 = vadd.s32 %v160, %v162
        %v164 = vstv %s157
        %vm165 = vcmp.ge.s32.totalorder %v163, %v164
        %v166 = vstv %s158
        %vm167 = vcmp.lt.s32.totalorder %v163, %v166
        %vm168 = vmand %vm165, %vm167
        %v169 = vld [vmem:[%s138] sm:$0xff]
        %v170 = vld [vmem:[%s138 + $0x8] sm:$0xff]
        %v171 = vsel %vm168, 0.0, %v169
        %v172 = vsel %vm168, 0.0, %v170
        %173 = vst [vmem:[%s156] sm:$0xff] %v171
        %174 = vst [vmem:[%s156 + $0x8] sm:$0xff] %v172
        %s175 = sand.u32 %s73, 1
        %s176 = scalar_lea.sflag [#allocation6], %s175
        %s177 = sand.u32 %s73, 1
        %s178 = smul.addr %s177, 16
        %s179 = scalar_lea.vmem [#allocation7], %s178
        // Predicated region
        $region29: #{tpu_custom_call.1} parent=23 // pred_check
          %p180 = pneg %p83
        $region30: #{tpu_custom_call.1} parent=23 // pred_check_branch
          %182 = sbr.rel (%p180) target = $region32
        $region31: #{tpu_custom_call.1} parent=23 // pred_region
          %s184 = ssub.s32 256, 256
          %185 = vsyncadd %s176, %s184
          %s186 = smul.addr %s27, 2
          %s187 = sadd.s32 %s28, %s186
          %s188 = smul.addr %s187, 128
          %s189 = scalar_lea.hbm %s2, %s188
          %s190 = sshll.u32 %s179, 4
          %s191 = int_to_ptr.vmem [resolvable:$true] %s190
          %196 = dma.vmem_to_hbm [thread:$0]  %s191, 256, %s189, %s176, 128, 128, 8
        $region32: #{tpu_custom_call.1} parent=23 // pred_fallthru
          _
      $region24: #{tpu_custom_call.1} parent=5 // pred_fallthru
        _
      %p197 = scmp.le.s32.totalorder 2, %s18
      // Predicated region
      $region33: #{tpu_custom_call.1} parent=5 // pred_check
        %p198 = pneg %p197
      $region34: #{tpu_custom_call.1} parent=5 // pred_check_branch
        %200 = sbr.rel (%p198) target = $region36
      $region35: #{tpu_custom_call.1} parent=5 // pred_region
        %s201 = ssub.s32 %s18, 2
        // Predicated region
        $region37: #{tpu_custom_call.1} parent=35 // pred_check
          %p202 = pneg %p89
        $region38: #{tpu_custom_call.1} parent=35 // pred_check_branch
          %204 = sbr.rel (%p202) target = $region40
        $region39: #{tpu_custom_call.1} parent=35 // pred_region
          %s205 = sand.u32 %s74, 1
          %s206 = scalar_lea.sflag [#allocation6], %s205
          %s207 = sand.u32 %s74, 1
          %s208 = smul.addr %s207, 16
          %s209 = scalar_lea.vmem [#allocation7], %s208
          %210 = dma.done %s206, 256
        $region40: #{tpu_custom_call.1} parent=35 // pred_fallthru
          _
      $region36: #{tpu_custom_call.1} parent=5 // pred_fallthru
        _
    $region6: #{tpu_custom_call.1} parent=1 // loop_footer
      %s22 = sadd.s32 1, %s18
    $region7: #{tpu_custom_call.1} parent=1 // loop_footer_branch
      %17 = sbr.rel target = $region3
    $region8: #{tpu_custom_call.1} parent=1 // loop_exit
      _
    %211 = vsyncpa [#allocation5], 1
    %s212 = scalar_lea.sflag [#allocation5], 1
    %213 = vsyncpa %s212, 1
    %214 = vsyncpa [#allocation6], 1
    %s215 = scalar_lea.sflag [#allocation6], 1
    %216 = vsyncpa %s215, 1

</llo_original>
